<compile_context>
chip_gen: v7x
topology: tpu7x:2x2x1
jax: 0.10.0
libtpu: 0.0.40
codegen_flags: <defaults>
</compile_context>

<pallas_src>
import math
import functools

import numpy as np
import jax
import jax.numpy as jnp
from jax.experimental import pallas as pl
from jax.experimental.pallas import tpu as pltpu


# ----------------------------- kernels --------------------------------------

def _qkv_kernel(x_ref, w_ref, b_ref, q_ref, k_ref, v_ref, *, nhd):
    """Fused Q/K/V projection for one row tile: (TM, D) @ (D, 3*NHD) + bias."""
    x = x_ref[...].astype(jnp.bfloat16)
    qkv = jnp.dot(x, w_ref[...], preferred_element_type=jnp.float32) + b_ref[...]
    q_ref[...] = qkv[:, :nhd].astype(q_ref.dtype)
    k_ref[...] = qkv[:, nhd:2 * nhd].astype(k_ref.dtype)
    v_ref[...] = qkv[:, 2 * nhd:].astype(v_ref.dtype)


def _attn_kernel(q_ref, k_ref, v_ref, mask_ref, wf_ref, bf_ref, o_ref):
    """Attention over all heads of one batch + fused output projection.

    q is pre-scaled by 1/sqrt(d_tensor) (folded into wq/bq in the wrapper).
    """
    q = q_ref[0]            # (H, S, HD) bf16 (already scaled)
    k = k_ref[0]            # (H, S, HD) bf16
    v = v_ref[0]            # (H, S, HD) bf16
    m = mask_ref[0, 0]      # (S, S)     int32

    # scores: contract last dims directly (no explicit k transpose relayout)
    score = jnp.einsum('hqd,hkd->hqk', q, k, preferred_element_type=jnp.float32)
    # exact reproduction of `score.masked_fill(mask == 0, -e)` with e = 1e-12
    score = jnp.where(m[None, :, :] == 0, jnp.float32(-1e-12), score)

    # numerically stable softmax over keys (f32); denominator via EUP reciprocal
    score = score - jnp.max(score, axis=-1, keepdims=True)
    p = jnp.exp(score)
    p = p * pl.reciprocal(jnp.sum(p, axis=-1, keepdims=True), approx=True)

    ctx = jnp.einsum('hqk,hkd->hqd', p.astype(jnp.bfloat16), v,
                     preferred_element_type=jnp.float32)          # (H, S, HD) f32

    # linear_final folded in: out[s, m] = sum_{h,d} ctx[h,s,d] * Wf[h*HD + d, m] + bf[m]
    proj = jnp.einsum('hsd,hdm->hsm', ctx.astype(jnp.bfloat16), wf_ref[...],
                      preferred_element_type=jnp.float32)         # (H, S, D)
    o_ref[0] = proj.sum(axis=0) + bf_ref[...]


# ----------------------------- wrapper ---------------------------------------

def _row_tile(n):
    # multiples of 16 (bf16-friendly sublane tiling); full extent as fallback
    for t in (512, 256, 128, 64, 32, 16):
        if n % t == 0 and t < n:
            return t
    return n


def multi_head_attention_forward(x, mask, p, n_head):
    """x: (B, S, D) f32; mask: (B, 1, S, S) int; weights pre-transposed to (in, out)."""
    B, S, D = x.shape
    HD = D                        # head_dim == model_dim in the reference module
    NHD = n_head * HD
    scale = 1.0 / math.sqrt(HD)   # folded into wq / bq (free, outside kernels)

    # ---- weight prep (one-time): fused QKV weight, bf16 matmul operands ----
    w_qkv = jnp.concatenate(
        [p['wq'] * scale, p['wk'], p['wv']], axis=1).astype(jnp.bfloat16)     # (D, 3*NHD)
    b_qkv = jnp.concatenate(
        [p['bq'] * scale, p['bk'], p['bv']], axis=1)                          # (1, 3*NHD) f32
    wf3 = p['wf'].astype(jnp.bfloat16).reshape(n_head, HD, D)                 # (H, HD, D)

    x2 = x.reshape(B * S, D)      # free row-major reshape

    # ---- kernel 1: fused, row-tiled Q/K/V projection ----
    TM = _row_tile(B * S)
    q2, k2, v2 = pl.pallas_call(
        functools.partial(_qkv_kernel, nhd=NHD),
        grid=((B * S) // TM,),
        in_specs=[pl.BlockSpec((TM, D), lambda i: (i, 0)),
                  pl.BlockSpec((D, 3 * NHD), lambda i: (0, 0)),
                  pl.BlockSpec((1, 3 * NHD), lambda i: (0, 0))],
        out_specs=[pl.BlockSpec((TM, NHD), lambda i: (i, 0))] * 3,
        out_shape=[jax.ShapeDtypeStruct((B * S, NHD), jnp.bfloat16)] * 3,
        compiler_params=pltpu.CompilerParams(dimension_semantics=("parallel",)),
    )(x2, w_qkv, b_qkv)

    # glue: torch `.view(batch, n_head, -1, head_dim)` == row-major reshape (free bitcast)
    q_v = q2.reshape(B, n_head, S, HD)
    k_v = k2.reshape(B, n_head, S, HD)
    v_v = v2.reshape(B, n_head, S, HD)

    # ---- kernel 2: attention (all heads of one batch per step) + output projection ----
    out = pl.pallas_call(
        _attn_kernel,
        grid=(B,),
        in_specs=[pl.BlockSpec((1, n_head, S, HD), lambda b: (b, 0, 0, 0)),
                  pl.BlockSpec((1, n_head, S, HD), lambda b: (b, 0, 0, 0)),
                  pl.BlockSpec((1, n_head, S, HD), lambda b: (b, 0, 0, 0)),
                  pl.BlockSpec((1, 1, S, S), lambda b: (b, 0, 0, 0)),   # no broadcast copy
                  pl.BlockSpec((n_head, HD, D), lambda b: (0, 0, 0)),   # VMEM-resident
                  pl.BlockSpec((1, D), lambda b: (0, 0))],
        out_specs=pl.BlockSpec((1, S, D), lambda b: (b, 0, 0)),
        out_shape=jax.ShapeDtypeStruct((B, S, D), jnp.float32),
        compiler_params=pltpu.CompilerParams(dimension_semantics=("parallel",)),
    )(q_v, k_v, v_v, mask, wf3, p['bf'])

    return out


# ----------------------------- pure-JAX reference ----------------------------

def reference(x, s_mask, p, n_head):
    B, S, D = x.shape
    HD = D
    q = x @ p['wq'] + p['bq'][0]
    k = x @ p['wk'] + p['bk'][0]
    v = x @ p['wv'] + p['bv'][0]
    q_ = q.reshape(B, n_head, S, HD)
    k_ = k.reshape(B, n_head, S, HD)
    v_ = v.reshape(B, n_head, S, HD)
    score = (q_ @ jnp.swapaxes(k_, 2, 3)) / math.sqrt(HD)
    score = jnp.where(s_mask == 0, -1e-12, score)
    attn = jax.nn.softmax(score, axis=3)
    ctx = attn @ v_
    ctx = jnp.swapaxes(ctx, 1, 2).reshape(B, S, n_head * HD)
    return ctx @ p['wf'] + p['bf'][0]


# ----------------------------- main -------------------------------------------

if __name__ == "__main__":
    B, S, model_dim, n_head = 2, 16, 32, 4
    HD = model_dim                       # head_dim == model_dim
    NHD = n_head * HD

    key = jax.random.PRNGKey(0)
    ks = jax.random.split(key, 8)

    def mk(k, shape, fan_in):
        return (jax.random.normal(k, shape, jnp.float32) / math.sqrt(fan_in)).astype(jnp.float32)

    params = {
        'wq': mk(ks[0], (model_dim, NHD), model_dim), 'bq': mk(ks[1], (1, NHD), NHD),
        'wk': mk(ks[2], (model_dim, NHD), model_dim), 'bk': mk(ks[3], (1, NHD), NHD),
        'wv': mk(ks[4], (model_dim, NHD), model_dim), 'bv': mk(ks[5], (1, NHD), NHD),
        'wf': mk(ks[6], (NHD, model_dim), NHD),       'bf': mk(ks[7], (1, model_dim), model_dim),
    }

    x = jax.random.normal(jax.random.PRNGKey(42), (B, S, model_dim), jnp.float32)
    # mask with some zeros to exercise the masked_fill path (broadcast over heads)
    s_mask = jnp.ones((B, 1, S, S), jnp.int32).at[:, :, :, -2:].set(0)

    out = multi_head_attention_forward(x, s_mask, params, n_head)
    out = jax.block_until_ready(out)

    ref = reference(x, s_mask, params, n_head)
    assert out.shape == (B, S, model_dim)
    # bf16 matmul operands with f32 accumulation vs an all-f32 reference
    err = float(np.max(np.abs(np.asarray(out) - np.asarray(ref))))
    assert np.allclose(np.asarray(out), np.asarray(ref), atol=3e-2, rtol=3e-2), err

    print("KERNEL_OK")
</pallas_src>

<mosaic_0001>
module attributes {stable_mosaic.version = 11 : i64} {
  func.func @_qkv_kernel(%arg0: i32, %arg1: memref<16x32xf32, #tpu.memory_space<vmem>>, %arg2: memref<32x384xbf16, #tpu.memory_space<vmem>>, %arg3: memref<1x384xf32, #tpu.memory_space<vmem>>, %arg4: memref<16x128xbf16, #tpu.memory_space<vmem>>, %arg5: memref<16x128xbf16, #tpu.memory_space<vmem>>, %arg6: memref<16x128xbf16, #tpu.memory_space<vmem>>) attributes {dimension_semantics = [#tpu.dimension_semantics<parallel>], iteration_bounds = array<i64: 2>, scalar_prefetch = 0 : i64, scratch_operands = 0 : i64, tpu.core_type = #tpu.core_type<tc>, window_params = [{transform_indices = @transform_0, window_bounds = array<i64: 16, 32>}, {pipeline_mode = #tpu.pipeline_mode<synchronous>, transform_indices = @transform_1, window_bounds = array<i64: 32, 384>}, {pipeline_mode = #tpu.pipeline_mode<synchronous>, transform_indices = @transform_2, window_bounds = array<i64: 1, 384>}, {transform_indices = @transform_3, window_bounds = array<i64: 16, 128>}, {transform_indices = @transform_4, window_bounds = array<i64: 16, 128>}, {transform_indices = @transform_5, window_bounds = array<i64: 16, 128>}]} {
    %c0 = arith.constant 0 : index
    %c0_0 = arith.constant 0 : index
    %0 = vector.load %arg1[%c0, %c0_0] : memref<16x32xf32, #tpu.memory_space<vmem>>, vector<16x32xf32>
    %1 = arith.truncf %0 : vector<16x32xf32> to vector<16x32xbf16>
    %c0_1 = arith.constant 0 : index
    %c0_2 = arith.constant 0 : index
    %2 = vector.load %arg2[%c0_1, %c0_2] : memref<32x384xbf16, #tpu.memory_space<vmem>>, vector<32x384xbf16>
    %cst = arith.constant dense<0.000000e+00> : vector<16x384xf32>
    %3 = tpu.matmul %1, %2, %cst {dimension_numbers = #tpu.dot_dimension_numbers<[1], [0], [0], [1], [0, 0, 1, 1], [], []>} : vector<16x32xbf16>, vector<32x384xbf16>, vector<16x384xf32> -> vector<16x384xf32>
    %c0_3 = arith.constant 0 : index
    %c0_4 = arith.constant 0 : index
    %4 = vector.load %arg3[%c0_3, %c0_4] : memref<1x384xf32, #tpu.memory_space<vmem>>, vector<1x384xf32>
    %5 = vector.broadcast %4 : vector<1x384xf32> to vector<16x384xf32>
    %6 = arith.addf %3, %5 : vector<16x384xf32>
    %7 = vector.extract_strided_slice %6 {offsets = [0, 0], sizes = [16, 128], strides = [1, 1]} : vector<16x384xf32> to vector<16x128xf32>
    %8 = arith.truncf %7 : vector<16x128xf32> to vector<16x128xbf16>
    %c0_5 = arith.constant 0 : index
    %c0_6 = arith.constant 0 : index
    %9 = vector.load %arg4[%c0_5, %c0_6] : memref<16x128xbf16, #tpu.memory_space<vmem>>, vector<16x128xbf16>
    tpu.vector_store %arg4[%c0_5, %c0_6], %8 {strides = array<i32>} : memref<16x128xbf16, #tpu.memory_space<vmem>>, vector<16x128xbf16>,
    %10 = vector.extract_strided_slice %6 {offsets = [0, 128], sizes = [16, 128], strides = [1, 1]} : vector<16x384xf32> to vector<16x128xf32>
    %11 = arith.truncf %10 : vector<16x128xf32> to vector<16x128xbf16>
    %c0_7 = arith.constant 0 : index
    %c0_8 = arith.constant 0 : index
    %12 = vector.load %arg5[%c0_7, %c0_8] : memref<16x128xbf16, #tpu.memory_space<vmem>>, vector<16x128xbf16>
    tpu.vector_store %arg5[%c0_7, %c0_8], %11 {strides = array<i32>} : memref<16x128xbf16, #tpu.memory_space<vmem>>, vector<16x128xbf16>,
    %13 = vector.extract_strided_slice %6 {offsets = [0, 256], sizes = [16, 128], strides = [1, 1]} : vector<16x384xf32> to vector<16x128xf32>
    %14 = arith.truncf %13 : vector<16x128xf32> to vector<16x128xbf16>
    %c0_9 = arith.constant 0 : index
    %c0_10 = arith.constant 0 : index
    %15 = vector.load %arg6[%c0_9, %c0_10] : memref<16x128xbf16, #tpu.memory_space<vmem>>, vector<16x128xbf16>
    tpu.vector_store %arg6[%c0_9, %c0_10], %14 {strides = array<i32>} : memref<16x128xbf16, #tpu.memory_space<vmem>>, vector<16x128xbf16>,
    return
  }
  func.func @transform_0(%arg0: i32) -> (i32, i32) {
    %c0_i32 = arith.constant 0 : i32
    %c0_i32_0 = arith.constant 0 : i32
    return %arg0, %c0_i32 : i32, i32
  }
  func.func @transform_1(%arg0: i32) -> (i32, i32) {
    %c0_i32 = arith.constant 0 : i32
    %c0_i32_0 = arith.constant 0 : i32
    %c0_i32_1 = arith.constant 0 : i32
    return %c0_i32, %c0_i32_0 : i32, i32
  }
  func.func @transform_2(%arg0: i32) -> (i32, i32) {
    %c0_i32 = arith.constant 0 : i32
    %c0_i32_0 = arith.constant 0 : i32
    %c0_i32_1 = arith.constant 0 : i32
    return %c0_i32, %c0_i32_0 : i32, i32
  }
  func.func @transform_3(%arg0: i32) -> (i32, i32) {
    %c0_i32 = arith.constant 0 : i32
    %c0_i32_0 = arith.constant 0 : i32
    return %arg0, %c0_i32 : i32, i32
  }
  func.func @transform_4(%arg0: i32) -> (i32, i32) {
    %c0_i32 = arith.constant 0 : i32
    %c0_i32_0 = arith.constant 0 : i32
    return %arg0, %c0_i32 : i32, i32
  }
  func.func @transform_5(%arg0: i32) -> (i32, i32) {
    %c0_i32 = arith.constant 0 : i32
    %c0_i32_0 = arith.constant 0 : i32
    return %arg0, %c0_i32 : i32, i32
  }
}

</mosaic_0001>

<llo_original>
// kernel: tpu_custom_call.1
$region0: #{tpu_custom_call.1}
  #allocation0 [shape = 'u32[]', space=smem, size = 0x4, offset = 0x4, fixed_abs, tag = 'smem constant byte address 0x4 - core index']
  #allocation1 [shape = 'u32[144,128]{1,0:T(1,128)}', space=vmem, size = 0x12000, scoped, tag = 'internal scratch']
  %s0 = inlined_call_operand.hbm [shape: f32[32,32], index: 0, kind: input, shape index: {}]
  %s1 = inlined_call_operand.hbm [shape: bf16[32,384], index: 1, kind: input, shape index: {}]
  %s2 = inlined_call_operand.vmem [shape: f32[1,384], index: 2, kind: input, shape index: {}]
  %s3 = inlined_call_operand.hbm [shape: bf16[32,128], index: 3, kind: output, shape index: {0}]
  %s4 = inlined_call_operand.hbm [shape: bf16[32,128], index: 4, kind: output, shape index: {1}]
  %s5 = inlined_call_operand.hbm [shape: bf16[32,128], index: 5, kind: output, shape index: {2}]
  %6 = xla_tuple %s3, %s4, %s5
  %s7 = sld [smem:[#allocation0]]
  $region69: #{tpu_custom_call.1} parent=0
    _
  %s9 = ssub.s32 1, %s7
  %s10 = scalar_select 0, %s9, %s7
  $region1: #{tpu_custom_call.1} parent=0
    #allocation2 [shape = 'u8[16384]{0}', space=vmem, size = 0x4000, scoped, tag = 'input window, operand 0']
    #allocation3 [shape = 's32[2]{0}', space=sflag, size = 0x8, scoped, tag = 'scoped memory for tpu_custom_call.1']
    #allocation4 [shape = 's32[2]{0}', space=sflag, size = 0x8, scoped, tag = 'scoped memory for tpu_custom_call.1']
    #allocation5 [shape = 'u8[24576]{0}', space=vmem, size = 0x6000, scoped, tag = 'input window, operand 1, single buffered']
    #allocation6 [shape = 's32[1]{0}', space=sflag, size = 0x4, scoped, tag = 'scoped memory for tpu_custom_call.1']
    #allocation7 [shape = 'u8[8192]{0}', space=vmem, size = 0x2000, scoped, tag = 'output window, operand 0']
    #allocation8 [shape = 'u8[8192]{0}', space=vmem, size = 0x2000, scoped, tag = 'output window, operand 1']
    #allocation9 [shape = 's32[2]{0}', space=sflag, size = 0x8, scoped, tag = 'scoped memory for tpu_custom_call.1']
    #allocation10 [shape = 'u8[8192]{0}', space=vmem, size = 0x2000, scoped, tag = 'output window, operand 2']
    %11 = vsyncpa [#allocation3], 0
    %s12 = scalar_lea.sflag [#allocation3], 1
    %13 = vsyncpa %s12, 0
    %14 = vsyncpa [#allocation6], 0
    %15 = vsyncpa [#allocation4], 0
    %s16 = scalar_lea.sflag [#allocation4], 1
    %17 = vsyncpa %s16, 0
    %18 = vsyncpa [#allocation9], 0
    %s19 = scalar_lea.sflag [#allocation9], 1
    %20 = vsyncpa %s19, 0
    loop: start=0, step=1, limit=4
    $region2: #{tpu_custom_call.1} parent=1 // loop_pre_header
      _
    $region3: #{tpu_custom_call.1} parent=1 // loop_header
      %s22 = sphi 0, %s26
      %p23 = scmp.ge.s32.totalorder %s22, 4
      %s32 = sphi 0, %s34
      %s35 = sphi 0, %s32
      %s36 = sphi 0, %s35
      %s52 = sphi 0, %s36
      %s56 = sphi 0, %s56
      %s58 = sphi 0, %s56
      %s59 = sphi 0, %s58
      %s73 = sphi 0, %s59
      %s77 = sphi 0, %s77
      %s79 = sphi 0, %s77
      %s80 = sphi 0, %s79
      %s94 = sphi 0, %s80
      %s100 = sphi 0, %s102
      %s103 = sphi 0, %s100
      %s104 = sphi 0, %s103
      %s120 = sphi 0, %s104
      %s126 = sphi 0, %s128
      %s129 = sphi 0, %s126
      %s130 = sphi 0, %s129
      %s146 = sphi 0, %s130
      %s152 = sphi 0, %s154
      %s155 = sphi 0, %s152
      %s156 = sphi 0, %s155
      %s172 = sphi 0, %s156
    $region4: #{tpu_custom_call.1} parent=1 // loop_header_branch
      %25 = sbr.rel (%p23) target = $region8
    $region5: #{tpu_custom_call.1} parent=1 // loop_body
      %s27 = ssub.s32 %s22, 1
      %s28 = ssub.s32 %s22, 2
      %s29 = sadd.s32 %s22, 1
      %s30 = ssub.s32 %s22, %s29
      %p31 = scmp.eq.s32.totalorder %s30, 0
      %s33 = sadd.s32 %s32, 1
      %s34 = scalar_select %p31, %s32, %s33
      %p37 = pneg %p31
      %p38 = scmp.eq.s32.totalorder %s22, 1
      %p39 = por %p37, %p38
      %p40 = scmp.ne.s32.totalorder %s32, %s35
      %p41 = scmp.eq.s32.totalorder %s22, 0
      %p42 = por %p40, %p41
      %p43 = scmp.ne.s32.totalorder %s32, %s35
      %p44 = scmp.eq.s32.totalorder %s27, 1
      %p45 = por %p43, %p44
      %p46 = scmp.ne.s32.totalorder %s35, %s36
      %p47 = scmp.eq.s32.totalorder %s27, 0
      %p48 = por %p46, %p47
      %p49 = scmp.ne.s32.totalorder %s35, %s36
      %p50 = scmp.eq.s32.totalorder %s28, 1
      %p51 = por %p49, %p50
      %p53 = scmp.ne.s32.totalorder %s36, %s52
      %p54 = scmp.eq.s32.totalorder %s28, 0
      %p55 = por %p53, %p54
      %s57 = sadd.s32 %s56, 1
      %p60 = scmp.eq.s32.totalorder %s22, 1
      %p61 = scmp.ne.s32.totalorder %s56, %s58
      %p62 = scmp.eq.s32.totalorder %s22, 0
      %p63 = por %p61, %p62
      %p64 = scmp.ne.s32.totalorder %s56, %s58
      %p65 = scmp.eq.s32.totalorder %s27, 1
      %p66 = por %p64, %p65
      %p67 = scmp.ne.s32.totalorder %s58, %s59
      %p68 = scmp.eq.s32.totalorder %s27, 0
      %p69 = por %p67, %p68
      %p70 = scmp.ne.s32.totalorder %s58, %s59
      %p71 = scmp.eq.s32.totalorder %s28, 1
      %p72 = por %p70, %p71
      %p74 = scmp.ne.s32.totalorder %s59, %s73
      %p75 = scmp.eq.s32.totalorder %s28, 0
      %p76 = por %p74, %p75
      %s78 = sadd.s32 %s77, 1
      %p81 = scmp.eq.s32.totalorder %s22, 1
      %p82 = scmp.ne.s32.totalorder %s77, %s79
      %p83 = scmp.eq.s32.totalorder %s22, 0
      %p84 = por %p82, %p83
      %p85 = scmp.ne.s32.totalorder %s77, %s79
      %p86 = scmp.eq.s32.totalorder %s27, 1
      %p87 = por %p85, %p86
      %p88 = scmp.ne.s32.totalorder %s79, %s80
      %p89 = scmp.eq.s32.totalorder %s27, 0
      %p90 = por %p88, %p89
      %p91 = scmp.ne.s32.totalorder %s79, %s80
      %p92 = scmp.eq.s32.totalorder %s28, 1
      %p93 = por %p91, %p92
      %p95 = scmp.ne.s32.totalorder %s80, %s94
      %p96 = scmp.eq.s32.totalorder %s28, 0
      %p97 = por %p95, %p96
      %s98 = ssub.s32 %s22, %s29
      %p99 = scmp.eq.s32.totalorder %s98, 0
      %s101 = sadd.s32 %s100, 1
      %s102 = scalar_select %p99, %s100, %s101
      %p105 = pneg %p99
      %p106 = scmp.eq.s32.totalorder %s22, 1
      %p107 = por %p105, %p106
      %p108 = scmp.ne.s32.totalorder %s100, %s103
      %p109 = scmp.eq.s32.totalorder %s22, 0
      %p110 = por %p108, %p109
      %p111 = scmp.ne.s32.totalorder %s100, %s103
      %p112 = scmp.eq.s32.totalorder %s27, 1
      %p113 = por %p111, %p112
      %p114 = scmp.ne.s32.totalorder %s103, %s104
      %p115 = scmp.eq.s32.totalorder %s27, 0
      %p116 = por %p114, %p115
      %p117 = scmp.ne.s32.totalorder %s103, %s104
      %p118 = scmp.eq.s32.totalorder %s28, 1
      %p119 = por %p117, %p118
      %p121 = scmp.ne.s32.totalorder %s104, %s120
      %p122 = scmp.eq.s32.totalorder %s28, 0
      %p123 = por %p121, %p122
      %s124 = ssub.s32 %s22, %s29
      %p125 = scmp.eq.s32.totalorder %s124, 0
      %s127 = sadd.s32 %s126, 1
      %s128 = scalar_select %p125, %s126, %s127
      %p131 = pneg %p125
      %p132 = scmp.eq.s32.totalorder %s22, 1
      %p133 = por %p131, %p132
      %p134 = scmp.ne.s32.totalorder %s126, %s129
      %p135 = scmp.eq.s32.totalorder %s22, 0
      %p136 = por %p134, %p135
      %p137 = scmp.ne.s32.totalorder %s126, %s129
      %p138 = scmp.eq.s32.totalorder %s27, 1
      %p139 = por %p137, %p138
      %p140 = scmp.ne.s32.totalorder %s129, %s130
      %p141 = scmp.eq.s32.totalorder %s27, 0
      %p142 = por %p140, %p141
      %p143 = scmp.ne.s32.totalorder %s129, %s130
      %p144 = scmp.eq.s32.totalorder %s28, 1
      %p145 = por %p143, %p144
      %p147 = scmp.ne.s32.totalorder %s130, %s146
      %p148 = scmp.eq.s32.totalorder %s28, 0
      %p149 = por %p147, %p148
      %s150 = ssub.s32 %s22, %s29
      %p151 = scmp.eq.s32.totalorder %s150, 0
      %s153 = sadd.s32 %s152, 1
      %s154 = scalar_select %p151, %s152, %s153
      %p157 = pneg %p151
      %p158 = scmp.eq.s32.totalorder %s22, 1
      %p159 = por %p157, %p158
      %p160 = scmp.ne.s32.totalorder %s152, %s155
      %p161 = scmp.eq.s32.totalorder %s22, 0
      %p162 = por %p160, %p161
      %p163 = scmp.ne.s32.totalorder %s152, %s155
      %p164 = scmp.eq.s32.totalorder %s27, 1
      %p165 = por %p163, %p164
      %p166 = scmp.ne.s32.totalorder %s155, %s156
      %p167 = scmp.eq.s32.totalorder %s27, 0
      %p168 = por %p166, %p167
      %p169 = scmp.ne.s32.totalorder %s155, %s156
      %p170 = scmp.eq.s32.totalorder %s28, 1
      %p171 = por %p169, %p170
      %p173 = scmp.ne.s32.totalorder %s156, %s172
      %p174 = scmp.eq.s32.totalorder %s28, 0
      %p175 = por %p173, %p174
      %p176 = scmp.le.s32.totalorder 1, %s22
      %p177 = scmp.lt.s32.totalorder %s22, 3
      %p178 = pnand %p176, %p177
      %p179 = pneg %p178
      // Predicated region
      $region9: #{tpu_custom_call.1} parent=5 // pred_check
        _
      $region10: #{tpu_custom_call.1} parent=5 // pred_check_branch
        %181 = sbr.rel (%p178) target = $region12
      $region11: #{tpu_custom_call.1} parent=5 // pred_region
        %s182 = ssub.s32 %s22, 1
        // Predicated region
        $region13: #{tpu_custom_call.1} parent=11 // pred_check
          %p183 = pneg %p69
        $region14: #{tpu_custom_call.1} parent=11 // pred_check_branch
          %185 = sbr.rel (%p183) target = $region16
        $region15: #{tpu_custom_call.1} parent=11 // pred_region
          %s187 = ssub.s32 768, 768
          %188 = vsyncadd [#allocation6], %s187
          %s189 = sshll.u32 [#allocation5], 4
          %s190 = int_to_ptr.vmem [resolvable:$true] %s189
          %195 = dma.hbm_to_vmem [thread:$0]  %s1, 768, %s190, [#allocation6], 192, 192, 12
        $region16: #{tpu_custom_call.1} parent=11 // pred_fallthru
          _
        // Predicated region
        $region17: #{tpu_custom_call.1} parent=11 // pred_check
          %p196 = pneg %p90
        $region18: #{tpu_custom_call.1} parent=11 // pred_check_branch
          %198 = sbr.rel (%p196) target = $region20
        $region19: #{tpu_custom_call.1} parent=11 // pred_region
          _
        $region20: #{tpu_custom_call.1} parent=11 // pred_fallthru
          _
      $region12: #{tpu_custom_call.1} parent=5 // pred_fallthru
        _
      %p199 = scmp.lt.s32.totalorder %s22, 2
      // Predicated region
      $region21: #{tpu_custom_call.1} parent=5 // pred_check
        %p200 = pneg %p199
      $region22: #{tpu_custom_call.1} parent=5 // pred_check_branch
        %202 = sbr.rel (%p200) target = $region24
      $region23: #{tpu_custom_call.1} parent=5 // pred_region
        // Predicated region
        $region25: #{tpu_custom_call.1} parent=23 // pred_check
          %p203 = pneg %p42
        $region26: #{tpu_custom_call.1} parent=23 // pred_check_branch
          %205 = sbr.rel (%p203) target = $region28
        $region27: #{tpu_custom_call.1} parent=23 // pred_region
          %s206 = sand.u32 %s32, 1
          %s207 = scalar_lea.sflag [#allocation3], %s206
          %s208 = sand.u32 %s32, 1
          %s209 = smul.addr %s208, 16
          %s210 = scalar_lea.vmem [#allocation2], %s209
          %s211 = smul.u32 2, %s22
          %s213 = ssub.s32 256, 256
          %214 = vsyncadd %s207, %s213
          %s215 = smul.addr %s211, 128
          %s216 = scalar_lea.hbm %s0, %s215
          %s217 = sshll.u32 %s210, 4
          %s218 = int_to_ptr.vmem [resolvable:$true] %s217
          %223 = dma.hbm_to_vmem [thread:$0]  %s216, 256, %s218, %s207, 128, 128, 8
        $region28: #{tpu_custom_call.1} parent=23 // pred_fallthru
          _
      $region24: #{tpu_custom_call.1} parent=5 // pred_fallthru
        _
      %p224 = scmp.le.s32.totalorder 1, %s22
      %p225 = scmp.lt.s32.totalorder %s22, 3
      %p226 = pnand %p224, %p225
      %p227 = pneg %p226
      // Predicated region
      $region29: #{tpu_custom_call.1} parent=5 // pred_check
        _
      $region30: #{tpu_custom_call.1} parent=5 // pred_check_branch
        %229 = sbr.rel (%p226) target = $region32
      $region31: #{tpu_custom_call.1} parent=5 // pred_region
        %s230 = ssub.s32 %s22, 1
        %s231 = sand.u32 %s35, 1
        %s232 = scalar_lea.sflag [#allocation3], %s231
        %s233 = sand.u32 %s35, 1
        %s234 = smul.addr %s233, 16
        %s235 = scalar_lea.vmem [#allocation2], %s234
        // Predicated region
        $region33: #{tpu_custom_call.1} parent=31 // pred_check
          %p236 = pneg %p48
        $region34: #{tpu_custom_call.1} parent=31 // pred_check_branch
          %238 = sbr.rel (%p236) target = $region36
        $region35: #{tpu_custom_call.1} parent=31 // pred_region
          %239 = dma.done %s232, 256
        $region36: #{tpu_custom_call.1} parent=31 // pred_fallthru
          _
        // Predicated region
        $region37: #{tpu_custom_call.1} parent=31 // pred_check
          %p240 = pneg %p69
        $region38: #{tpu_custom_call.1} parent=31 // pred_check_branch
          %242 = sbr.rel (%p240) target = $region40
        $region39: #{tpu_custom_call.1} parent=31 // pred_region
          %243 = dma.done [#allocation6], 768
        $region40: #{tpu_custom_call.1} parent=31 // pred_fallthru
          _
        %s244 = sand.u32 %s35, 1
        %s245 = scalar_lea.sflag [#allocation3], %s244
        %s246 = sand.u32 %s35, 1
        %s247 = smul.addr %s246, 16
        %s248 = scalar_lea.vmem [#allocation2], %s247
        %p249 = pneg %p48
        %p250 = pneg %p45
        %p251 = pneg %p69
        %p252 = pneg %p66
        %p253 = pneg %p90
        %p254 = pneg %p87
        %p255 = pneg %p116
        %p256 = pneg %p113
        %s257 = sand.u32 %s103, 1
        %s258 = scalar_lea.sflag [#allocation4], %s257
        %s259 = sand.u32 %s103, 1
        %s260 = smul.addr %s259, 8
        %s261 = scalar_lea.vmem [#allocation7], %s260
        %p262 = pneg %p142
        %p263 = pneg %p139
        %s264 = sand.u32 %s27, 1
        %s265 = scalar_lea.sflag [#allocation9], %s264
        %s266 = sand.u32 %s129, 1
        %s267 = smul.addr %s266, 8
        %s268 = scalar_lea.vmem [#allocation8], %s267
        %p269 = pneg %p168
        %p270 = pneg %p165
        %s271 = sand.u32 %s27, 1
        %s272 = scalar_lea.sflag [#allocation9], %s271
        %s273 = sand.u32 %s155, 1
        %s274 = smul.addr %s273, 8
        %s275 = scalar_lea.vmem [#allocation10], %s274
        %s276 = smul.u32 2, %s27
        %s277 = smul.u32 2, %s27
        %s278 = smul.u32 2, %s27
        %s279 = smul.u32 2, %s27
        %v281 = vld [vmem:[%s235] sm:$0xff]
        %v282 = vld [vmem:[%s235 + $0x8] sm:$0xff]
        %v283 = vpack.c.bf16 %v282, %v281
        %v284 = vld [vmem:[#allocation5] sm:$0xff]
        %v285 = vld [vmem:[#allocation5 + $0x8] sm:$0xf]
        %v286 = vld [vmem:[#allocation5 + $0xc] sm:$0xff]
        %v287 = vld [vmem:[#allocation5 + $0x14] sm:$0xf]
        %v288 = vld [vmem:[#allocation5 + $0x18] sm:$0xff]
        %v289 = vld [vmem:[#allocation5 + $0x20] sm:$0xf]
        %v290 = vld [vmem:[#allocation5 + $0x24] sm:$0xff]
        %v291 = vld [vmem:[#allocation5 + $0x2c] sm:$0xf]
        %v292 = vld [vmem:[%s2] sm:$0x7]
        %v294 = vlaneseq
        %v295 = vshrl.u32 %v294, 7
        %v296 = vsub.s32 0, %v295
        %v297 = vrot.slane %v292, %v296
        %v298 = vlaneseq
        %v299 = vshrl.u32 %v298, 7
        %v300 = vsub.s32 1, %v299
        %v301 = vrot.slane %v292, %v300
        %v302 = vlaneseq
        %v303 = vshrl.u32 %v302, 7
        %v304 = vsub.s32 2, %v303
        %v305 = vrot.slane %v292, %v304
        %v317 = vunpack.c.l.b16 %v284
        %v318 = vunpack.c.h.b16 %v284
        %v319 = vunpack.c.l.b16 %v285
        %v320 = vunpack.c.l.b16 %v286
        %v321 = vunpack.c.h.b16 %v286
        %v322 = vunpack.c.l.b16 %v287
        %v323 = vunpack.c.l.b16 %v288
        %v324 = vunpack.c.h.b16 %v288
        %v325 = vunpack.c.l.b16 %v289
        %v326 = vunpack.c.l.b16 %v290
        %v327 = vunpack.c.h.b16 %v290
        %v328 = vunpack.c.l.b16 %v291
        %v329 = vpack.c.b16 %v320, %v317
        %v330 = vpack.c.b16 %v321, %v318
        %v331 = vpack.c.b16 %v322, %v319
        %v332 = vpack.c.b16 %v326, %v323
        %v333 = vpack.c.b16 %v327, %v324
        %v334 = vpack.c.b16 %v328, %v325
        %vm341 = vcmask 261120
        %v343 = vsel %vm341, %v283, 0
        %345 = vmatprep.subr.bf16.mxu0 %v330
        %346 = vmatpush1.bf16.msra.mxu0 %v329
        %347 = vmatprep.subr.bf16.mxu0 %v333
        %348 = vmatpush1.bf16.msra.mxu0 %v332
        %349 = vmatprep.subr.bf16.mxu0 0
        %350 = vmatpush1.bf16.msra.mxu0 0
        %351 = vmatprep.subr.bf16.mxu0 0
        %352 = vmatpush1.bf16.msra.mxu0 0
        %353 = vmatprep.subr.bf16.mxu0 0
        %354 = vmatpush1.bf16.msra.mxu0 0
        %355 = vmatprep.subr.bf16.mxu0 0
        %356 = vmatpush1.bf16.msra.mxu0 0
        %357 = vmatprep.subr.bf16.mxu0 0
        %358 = vmatpush1.bf16.msra.mxu0 0
        %359 = vmatprep.subr.bf16.mxu0 0
        %360 = vmatpush1.bf16.msra.mxu0 0
        %361 = vmatprep.subr.bf16.mxu0 0
        %362 = vmatpush1.bf16.msra.mxu0 0
        %363 = vmatprep.subr.bf16.mxu0 0
        %364 = vmatpush1.bf16.msra.mxu0 0
        %365 = vmatprep.subr.bf16.mxu0 0
        %366 = vmatpush1.bf16.msra.mxu0 0
        %367 = vmatprep.subr.bf16.mxu0 0
        %368 = vmatpush1.bf16.msra.mxu0 0
        %369 = vmatprep.subr.bf16.mxu0 0
        %370 = vmatpush1.bf16.msra.mxu0 0
        %371 = vmatprep.subr.bf16.mxu0 0
        %372 = vmatpush1.bf16.msra.mxu0 0
        %373 = vmatprep.subr.bf16.mxu0 0
        %374 = vmatpush1.bf16.msra.mxu0 0
        %375 = vmatprep.subr.bf16.mxu0 0
        %376 = vmatpush1.bf16.msra.mxu0 0
        %377 = vmatprep.mubr.bf16.mxu0 0
        %378 = vmatmul.mubr.bf16.gmra.mrb[0].mxu0 %v343
        %v379 = vpop.f32.mrb[0].mxu0
        %v380 = vadd.f32 %v297, %v379
        %v381 = vpop.f32.mrb[0].mxu0
        %v382 = vadd.f32 %v301, %v381
        %v383 = vpop.f32.mrb[0].mxu0
        %v384 = vadd.f32 %v297, %v383
        %v385 = vpop.f32.mrb[0].mxu0
        %v386 = vadd.f32 %v301, %v385
        %387 = vdwg.mxu0
        %388 = vmatprep.subr.bf16.mxu0 0
        %389 = vmatpush1.bf16.msra.mxu0 %v331
        %390 = vmatprep.subr.bf16.mxu0 0
        %391 = vmatpush1.bf16.msra.mxu0 %v334
        %392 = vmatprep.subr.bf16.mxu0 0
        %393 = vmatpush1.bf16.msra.mxu0 0
        %394 = vmatprep.subr.bf16.mxu0 0
        %395 = vmatpush1.bf16.msra.mxu0 0
        %396 = vmatprep.subr.bf16.mxu0 0
        %397 = vmatpush1.bf16.msra.mxu0 0
        %398 = vmatprep.subr.bf16.mxu0 0
        %399 = vmatpush1.bf16.msra.mxu0 0
        %400 = vmatprep.subr.bf16.mxu0 0
        %401 = vmatpush1.bf16.msra.mxu0 0
        %402 = vmatprep.subr.bf16.mxu0 0
        %403 = vmatpush1.bf16.msra.mxu0 0
        %404 = vmatprep.subr.bf16.mxu0 0
        %405 = vmatpush1.bf16.msra.mxu0 0
        %406 = vmatprep.subr.bf16.mxu0 0
        %407 = vmatpush1.bf16.msra.mxu0 0
        %408 = vmatprep.subr.bf16.mxu0 0
        %409 = vmatpush1.bf16.msra.mxu0 0
        %410 = vmatprep.subr.bf16.mxu0 0
        %411 = vmatpush1.bf16.msra.mxu0 0
        %412 = vmatprep.subr.bf16.mxu0 0
        %413 = vmatpush1.bf16.msra.mxu0 0
        %414 = vmatprep.subr.bf16.mxu0 0
        %415 = vmatpush1.bf16.msra.mxu0 0
        %416 = vmatprep.subr.bf16.mxu0 0
        %417 = vmatpush1.bf16.msra.mxu0 0
        %418 = vmatprep.subr.bf16.mxu0 0
        %419 = vmatpush1.bf16.msra.mxu0 0
        %420 = vmatprep.mubr.bf16.mxu0 0
        %421 = vmatmul.mubr.bf16.gmra.mrb[0].mxu0 %v343
        %v422 = vpop.f32.mrb[0].mxu0
        %v423 = vadd.f32 %v305, %v422
        %v424 = vpop.f32.mrb[0].mxu0
        %v425 = vpop.f32.mrb[0].mxu0
        %v426 = vadd.f32 %v305, %v425
        %v427 = vpop.f32.mrb[0].mxu0
        %428 = vdwg.mxu0
        %v429 = vpack.c.bf16 %v384, %v380
        %v431 = vunpack.c.l.b16 %v429
        %v432 = vunpack.c.h.b16 %v429
        %v433 = vpack.c.b16 %v431, %v431
        %v434 = vpack.c.b16 %v432, %v432
        %437 = vst [vmem:[%s261] sm:$0xf] %v433
        %438 = vst [vmem:[%s261 + $0x4] sm:$0xf] %v434
        %v439 = vpack.c.bf16 %v386, %v382
        %v441 = vunpack.c.l.b16 %v439
        %v442 = vunpack.c.h.b16 %v439
        %v443 = vpack.c.b16 %v441, %v441
        %v444 = vpack.c.b16 %v442, %v442
        %447 = vst [vmem:[%s268] sm:$0xf] %v443
        %448 = vst [vmem:[%s268 + $0x4] sm:$0xf] %v444
        %v449 = vpack.c.bf16 %v426, %v423
        %v451 = vunpack.c.l.b16 %v449
        %v452 = vunpack.c.h.b16 %v449
        %v453 = vpack.c.b16 %v451, %v451
        %v454 = vpack.c.b16 %v452, %v452
        %457 = vst [vmem:[%s275] sm:$0xf] %v453
        %458 = vst [vmem:[%s275 + $0x4] sm:$0xf] %v454
        %s459 = sand.u32 %s103, 1
        %s460 = scalar_lea.sflag [#allocation4], %s459
        %s461 = sand.u32 %s103, 1
        %s462 = smul.addr %s461, 8
        %s463 = scalar_lea.vmem [#allocation7], %s462
        %s464 = sand.u32 %s27, 1
        %s465 = scalar_lea.sflag [#allocation9], %s464
        %s466 = sand.u32 %s129, 1
        %s467 = smul.addr %s466, 8
        %s468 = scalar_lea.vmem [#allocation8], %s467
        %s469 = sand.u32 %s27, 1
        %s470 = scalar_lea.sflag [#allocation9], %s469
        %s471 = sand.u32 %s155, 1
        %s472 = smul.addr %s471, 8
        %s473 = scalar_lea.vmem [#allocation10], %s472
        // Predicated region
        $region41: #{tpu_custom_call.1} parent=31 // pred_check
          %p474 = pneg %p113
        $region42: #{tpu_custom_call.1} parent=31 // pred_check_branch
          %476 = sbr.rel (%p474) target = $region44
        $region43: #{tpu_custom_call.1} parent=31 // pred_region
          %s477 = smul.u32 2, %s27
          %s479 = ssub.s32 128, 128
          %480 = vsyncadd %s460, %s479
          %s481 = smul.addr %s477, 64
          %s482 = scalar_lea.hbm %s3, %s481
          %s483 = sshll.u32 %s463, 4
          %s484 = int_to_ptr.vmem [resolvable:$true] %s483
          %489 = dma.vmem_to_hbm [thread:$0]  %s484, 128, %s482, %s460, 64, 64, 4
        $region44: #{tpu_custom_call.1} parent=31 // pred_fallthru
          _
        // Predicated region
        $region45: #{tpu_custom_call.1} parent=31 // pred_check
          %p490 = pneg %p139
        $region46: #{tpu_custom_call.1} parent=31 // pred_check_branch
          %492 = sbr.rel (%p490) target = $region48
        $region47: #{tpu_custom_call.1} parent=31 // pred_region
          %s493 = smul.u32 2, %s27
          %s495 = ssub.s32 128, 128
          %496 = vsyncadd %s465, %s495
          %s497 = smul.addr %s493, 64
          %s498 = scalar_lea.hbm %s4, %s497
          %s499 = sshll.u32 %s468, 4
          %s500 = int_to_ptr.vmem [resolvable:$true] %s499
          %505 = dma.vmem_to_hbm [thread:$0]  %s500, 128, %s498, %s465, 64, 64, 4
        $region48: #{tpu_custom_call.1} parent=31 // pred_fallthru
          _
        // Predicated region
        $region49: #{tpu_custom_call.1} parent=31 // pred_check
          %p506 = pneg %p165
        $region50: #{tpu_custom_call.1} parent=31 // pred_check_branch
          %508 = sbr.rel (%p506) target = $region52
        $region51: #{tpu_custom_call.1} parent=31 // pred_region
          %s509 = smul.u32 2, %s27
          %s511 = ssub.s32 128, 128
          %512 = vsyncadd %s470, %s511
          %s513 = smul.addr %s509, 64
          %s514 = scalar_lea.hbm %s5, %s513
          %s515 = sshll.u32 %s473, 4
          %s516 = int_to_ptr.vmem [resolvable:$true] %s515
          %521 = dma.vmem_to_hbm [thread:$0]  %s516, 128, %s514, %s470, 64, 64, 4
        $region52: #{tpu_custom_call.1} parent=31 // pred_fallthru
          _
      $region32: #{tpu_custom_call.1} parent=5 // pred_fallthru
        _
      %p522 = scmp.le.s32.totalorder 2, %s22
      // Predicated region
      $region53: #{tpu_custom_call.1} parent=5 // pred_check
        %p523 = pneg %p522
      $region54: #{tpu_custom_call.1} parent=5 // pred_check_branch
        %525 = sbr.rel (%p523) target = $region56
      $region55: #{tpu_custom_call.1} parent=5 // pred_region
        %s526 = ssub.s32 %s22, 2
        // Predicated region
        $region57: #{tpu_custom_call.1} parent=55 // pred_check
          %p527 = pneg %p119
        $region58: #{tpu_custom_call.1} parent=55 // pred_check_branch
          %529 = sbr.rel (%p527) target = $region60
        $region59: #{tpu_custom_call.1} parent=55 // pred_region
          %s530 = sand.u32 %s104, 1
          %s531 = scalar_lea.sflag [#allocation4], %s530
          %s532 = sand.u32 %s104, 1
          %s533 = smul.addr %s532, 8
          %s534 = scalar_lea.vmem [#allocation7], %s533
          %535 = dma.done %s531, 128
        $region60: #{tpu_custom_call.1} parent=55 // pred_fallthru
          _
        // Predicated region
        $region61: #{tpu_custom_call.1} parent=55 // pred_check
          %p536 = pneg %p145
        $region62: #{tpu_custom_call.1} parent=55 // pred_check_branch
          %538 = sbr.rel (%p536) target = $region64
        $region63: #{tpu_custom_call.1} parent=55 // pred_region
          %s539 = sand.u32 %s28, 1
          %s540 = scalar_lea.sflag [#allocation9], %s539
          %s541 = sand.u32 %s130, 1
          %s542 = smul.addr %s541, 8
          %s543 = scalar_lea.vmem [#allocation8], %s542
          %544 = dma.done %s540, 128
        $region64: #{tpu_custom_call.1} parent=55 // pred_fallthru
          _
        // Predicated region
        $region65: #{tpu_custom_call.1} parent=55 // pred_check
          %p545 = pneg %p171
        $region66: #{tpu_custom_call.1} parent=55 // pred_check_branch
          %547 = sbr.rel (%p545) target = $region68
        $region67: #{tpu_custom_call.1} parent=55 // pred_region
          %s548 = sand.u32 %s28, 1
          %s549 = scalar_lea.sflag [#allocation9], %s548
          %s550 = sand.u32 %s156, 1
          %s551 = smul.addr %s550, 8
          %s552 = scalar_lea.vmem [#allocation10], %s551
          %553 = dma.done %s549, 128
        $region68: #{tpu_custom_call.1} parent=55 // pred_fallthru
          _
      $region56: #{tpu_custom_call.1} parent=5 // pred_fallthru
        _
    $region6: #{tpu_custom_call.1} parent=1 // loop_footer
      %s26 = sadd.s32 1, %s22
    $region7: #{tpu_custom_call.1} parent=1 // loop_footer_branch
      %21 = sbr.rel target = $region3
    $region8: #{tpu_custom_call.1} parent=1 // loop_exit
      _
    %554 = vsyncpa [#allocation3], 1
    %s555 = scalar_lea.sflag [#allocation3], 1
    %556 = vsyncpa %s555, 1
    %557 = vsyncpa [#allocation6], 1
    %558 = vsyncpa [#allocation4], 1
    %s559 = scalar_lea.sflag [#allocation4], 1
    %560 = vsyncpa %s559, 1
    %561 = vsyncpa [#allocation9], 1
    %s562 = scalar_lea.sflag [#allocation9], 1
    %563 = vsyncpa %s562, 1

</llo_original>
